<compile_context>
chip_gen: v6e
topology: v6e:2x2x1
jax: 0.10.0
libtpu: 0.0.40
codegen_flags: <defaults>
</compile_context>

<pallas_src>
import jax
import jax.numpy as jnp
from jax.experimental import pallas as pl
from jax.experimental.pallas import tpu as pltpu


def _pool_kernel(x_ref, q_ref, wvt_ref, wot_ref, o_ref):
    # x_ref:   (TB, F, d)
    # q_ref:   (1, d)
    # wvt_ref: (d, d) stored as (in, out)   -- Wv^T
    # wot_ref: (d, d) stored as (in, out)   -- Wo^T
    # o_ref:   (TB, d)
    tb, f, d = x_ref.shape
    x = x_ref[...]                                          # (TB, F, d) f32
    q = q_ref[...]                                          # (1, d)

    # attention scores: per-row dot with the query -> (TB, F, 1)  (VPU + XLU)
    scores = jnp.sum(x * q, axis=-1, keepdims=True)         # (TB, F, 1)

    # softmax over F (default mask is all-False -> plain softmax); the
    # normalization is deferred to after the weighted sum.
    m = jnp.max(scores, axis=1, keepdims=True)              # (TB, 1, 1)
    e = jnp.exp(scores - m)                                 # (TB, F, 1)
    denom = jnp.sum(e, axis=1, keepdims=True)               # (TB, 1, 1)

    # V = nan_to_num(x @ Wv^T); weight pre-transposed -> contract last dims
    v = jnp.dot(x.reshape(tb * f, d), wvt_ref[...],
                preferred_element_type=jnp.float32)         # (TB*F, d) MXU
    v = jnp.nan_to_num(v).reshape(tb, f, d)                 # (TB, F, d)

    # pooled_b = (sum_f e[b, f] * V[b, f, :]) / denom[b]  -> (TB, d)
    num = jnp.sum(e * v, axis=1)                            # (TB, d)
    pooled = num * pl.reciprocal(denom[:, 0, :], approx=True)  # (TB, d)

    # out = pooled @ Wo^T  (fused out_proj, MXU)
    o_ref[...] = jnp.dot(pooled, wot_ref[...],
                         preferred_element_type=jnp.float32).astype(o_ref.dtype)


def global_projected_attention_pool1d(x, query, w_v, w_o, *, tb=None):
    """x: (B, F, d) f32; query: (1, d); w_v, w_o: (d, d) PyTorch (out, in).

    Returns (B, d).
    """
    B, F, d = x.shape

    if tb is None:
        # Fill the MXU M dim (TB*F rows per V-proj matmul) ...
        tb = max(1, min(B, max(1, 256 // max(F, 1))))
        # ... but keep >= 2 grid steps when the batch allows (v7x has 2 TCs).
        if B >= 2 and B // tb < 2:
            tb = max(1, B // 2)
    # Keep the grid clean: shrink TB to a divisor of B.
    while B % tb:
        tb -= 1
    grid = (B // tb,)

    # Pre-transpose the constant weights once, outside the kernel.
    w_v_t = w_v.T                                           # (in, out)
    w_o_t = w_o.T                                           # (in, out)

    # NOTE: q / Wv^T / Wo^T have constant block indices (shared across all
    # grid steps); for very large d one could single-buffer them
    # (pipeline_mode=pl.Buffered(1)) to save VMEM on v7x.
    out = pl.pallas_call(
        _pool_kernel,
        out_shape=jax.ShapeDtypeStruct((B, d), x.dtype),
        grid_spec=pltpu.PrefetchScalarGridSpec(
            num_scalar_prefetch=0,
            grid=grid,
            in_specs=[
                pl.BlockSpec((tb, F, d), lambda b: (b, 0, 0)),  # x block
                pl.BlockSpec((1, d), lambda b: (0, 0)),         # query (shared)
                pl.BlockSpec((d, d), lambda b: (0, 0)),         # Wv^T (shared)
                pl.BlockSpec((d, d), lambda b: (0, 0)),         # Wo^T (shared)
            ],
            out_specs=pl.BlockSpec((tb, d), lambda b: (b, 0)),
        ),
        compiler_params=pltpu.CompilerParams(
            dimension_semantics=("parallel",),
            vmem_limit_bytes=64 * 1024 * 1024,  # above 16/32 MiB scoped defaults
        ),
    )(x, query, w_v_t, w_o_t)
    return out


def _reference(x, query, w_v, w_o):
    """Plain-JAX reference mirroring the PyTorch forward (default mask)."""
    scores = jnp.einsum("bfd,od->bof", x, query)            # (B, 1, F)
    weights = jax.nn.softmax(scores, axis=-1)               # (B, 1, F)
    v = jnp.nan_to_num(jnp.einsum("bfd,ed->bfe", x, w_v))   # (B, F, d)
    pooled = jnp.einsum("bof,bfd->bod", weights, v)[:, 0]   # (B, d)
    return pooled @ w_o.T


if __name__ == "__main__":
    # d = 128 (lane-dense); TB defaults to 8 -> grid of 2 aligned (8, 128) blocks.
    B, F, d = 16, 16, 128
    key = jax.random.PRNGKey(0)
    kx, kq, kk, kv, ko = jax.random.split(key, 5)

    x = jax.random.normal(kx, (B, F, d), dtype=jnp.float32)

    # Deterministic parameter init (shapes from the module's __init__).
    query = 0.02 * jax.random.normal(kq, (1, d), dtype=jnp.float32)
    bound = 1.0 / jnp.sqrt(d)  # nn.Linear default uniform bound
    w_k = jax.random.uniform(kk, (d, d), jnp.float32, -bound, bound)  # unused in forward
    w_v = jax.random.uniform(kv, (d, d), jnp.float32, -bound, bound)
    w_o = jax.random.uniform(ko, (d, d), jnp.float32, -bound, bound)

    out = global_projected_attention_pool1d(x, query, w_v, w_o)
    out = jax.block_until_ready(out)

    ref = _reference(x, query, w_v, w_o)
    assert out.shape == (B, d)
    # approx reciprocal in the softmax denominator perturbs normalization by
    # O(1e-3) relative at most; tolerance chosen accordingly.
    assert jnp.allclose(out, ref, atol=5e-3, rtol=5e-3), float(
        jnp.max(jnp.abs(out - ref)))
    print("KERNEL_OK")
</pallas_src>

<mosaic_0001>
module attributes {stable_mosaic.version = 11 : i64} {
  func.func @_pool_kernel(%arg0: i32, %arg1: memref<8x16x128xf32, #tpu.memory_space<vmem>>, %arg2: memref<1x128xf32, #tpu.memory_space<vmem>>, %arg3: memref<128x128xf32, #tpu.memory_space<vmem>>, %arg4: memref<128x128xf32, #tpu.memory_space<vmem>>, %arg5: memref<8x128xf32, #tpu.memory_space<vmem>>) attributes {dimension_semantics = [#tpu.dimension_semantics<parallel>], iteration_bounds = array<i64: 2>, scalar_prefetch = 0 : i64, scratch_operands = 0 : i64, tpu.core_type = #tpu.core_type<tc>, window_params = [{transform_indices = @transform_0, window_bounds = array<i64: 8, 16, 128>}, {pipeline_mode = #tpu.pipeline_mode<synchronous>, transform_indices = @transform_1, window_bounds = array<i64: 1, 128>}, {pipeline_mode = #tpu.pipeline_mode<synchronous>, transform_indices = @transform_2, window_bounds = array<i64: 128, 128>}, {pipeline_mode = #tpu.pipeline_mode<synchronous>, transform_indices = @transform_3, window_bounds = array<i64: 128, 128>}, {transform_indices = @transform_4, window_bounds = array<i64: 8, 128>}]} {
    %c0 = arith.constant 0 : index
    %c0_0 = arith.constant 0 : index
    %c0_1 = arith.constant 0 : index
    %0 = vector.load %arg1[%c0, %c0_0, %c0_1] : memref<8x16x128xf32, #tpu.memory_space<vmem>>, vector<8x16x128xf32>
    %c0_2 = arith.constant 0 : index
    %c0_3 = arith.constant 0 : index
    %1 = vector.load %arg2[%c0_2, %c0_3] : memref<1x128xf32, #tpu.memory_space<vmem>>, vector<1x128xf32>
    %2 = vector.shape_cast %1 : vector<1x128xf32> to vector<1x1x128xf32>
    %3 = vector.broadcast %2 : vector<1x1x128xf32> to vector<8x16x128xf32>
    %4 = arith.mulf %0, %3 : vector<8x16x128xf32>
    %cst = arith.constant dense<0.000000e+00> : vector<8x16xf32>
    %5 = vector.multi_reduction <add>, %4, %cst [2] : vector<8x16x128xf32> to vector<8x16xf32>
    %6 = vector.shape_cast %5 : vector<8x16xf32> to vector<8x16x1xf32>
    %cst_4 = arith.constant dense<0xFF800000> : vector<8x1xf32>
    %7 = vector.multi_reduction <maximumf>, %6, %cst_4 [1] : vector<8x16x1xf32> to vector<8x1xf32>
    %8 = vector.shape_cast %7 : vector<8x1xf32> to vector<8x1x1xf32>
    %9 = vector.broadcast %8 : vector<8x1x1xf32> to vector<8x16x1xf32>
    %10 = arith.subf %6, %9 : vector<8x16x1xf32>
    %11 = math.exp %10 : vector<8x16x1xf32>
    %cst_5 = arith.constant dense<0.000000e+00> : vector<8x1xf32>
    %12 = vector.multi_reduction <add>, %11, %cst_5 [1] : vector<8x16x1xf32> to vector<8x1xf32>
    %13 = vector.shape_cast %12 : vector<8x1xf32> to vector<8x1x1xf32>
    %14 = vector.shape_cast %0 : vector<8x16x128xf32> to vector<128x128xf32>
    %c0_6 = arith.constant 0 : index
    %c0_7 = arith.constant 0 : index
    %15 = vector.load %arg3[%c0_6, %c0_7] : memref<128x128xf32, #tpu.memory_space<vmem>>, vector<128x128xf32>
    %cst_8 = arith.constant dense<0.000000e+00> : vector<128x128xf32>
    %16 = tpu.matmul %14, %15, %cst_8 {dimension_numbers = #tpu.dot_dimension_numbers<[1], [0], [0], [1], [0, 0, 1, 1], [], []>} : vector<128x128xf32>, vector<128x128xf32>, vector<128x128xf32> -> vector<128x128xf32>
    %17 = arith.cmpf one, %16, %16 : vector<128x128xf32>
    %cst_9 = arith.constant 0.000000e+00 : f32
    %18 = vector.broadcast %cst_9 : f32 to vector<128x128xf32>
    %19 = arith.select %17, %18, %16 : vector<128x128xi1>, vector<128x128xf32>
    %cst_10 = arith.constant 0x7F800000 : f32
    %20 = vector.broadcast %cst_10 : f32 to vector<128x128xf32>
    %21 = arith.cmpf oeq, %19, %20 : vector<128x128xf32>
    %cst_11 = arith.constant 3.40282347E+38 : f32
    %22 = vector.broadcast %cst_11 : f32 to vector<128x128xf32>
    %23 = arith.select %21, %22, %19 : vector<128x128xi1>, vector<128x128xf32>
    %cst_12 = arith.constant 0xFF800000 : f32
    %24 = vector.broadcast %cst_12 : f32 to vector<128x128xf32>
    %25 = arith.cmpf oeq, %23, %24 : vector<128x128xf32>
    %cst_13 = arith.constant -3.40282347E+38 : f32
    %26 = vector.broadcast %cst_13 : f32 to vector<128x128xf32>
    %27 = arith.select %25, %26, %23 : vector<128x128xi1>, vector<128x128xf32>
    %28 = vector.shape_cast %27 : vector<128x128xf32> to vector<8x16x128xf32>
    %29 = vector.broadcast %11 : vector<8x16x1xf32> to vector<8x16x128xf32>
    %30 = arith.mulf %29, %28 : vector<8x16x128xf32>
    %cst_14 = arith.constant dense<0.000000e+00> : vector<8x128xf32>
    %31 = vector.multi_reduction <add>, %30, %cst_14 [1] : vector<8x16x128xf32> to vector<8x128xf32>
    %32 = vector.shape_cast %13 : vector<8x1x1xf32> to vector<8x1xf32>
    %33 = tpu.reciprocal %32 {approx = true} : vector<8x1xf32> -> vector<8x1xf32>
    %34 = vector.broadcast %33 : vector<8x1xf32> to vector<8x128xf32>
    %35 = arith.mulf %31, %34 : vector<8x128xf32>
    %c0_15 = arith.constant 0 : index
    %c0_16 = arith.constant 0 : index
    %36 = vector.load %arg4[%c0_15, %c0_16] : memref<128x128xf32, #tpu.memory_space<vmem>>, vector<128x128xf32>
    %cst_17 = arith.constant dense<0.000000e+00> : vector<8x128xf32>
    %37 = tpu.matmul %35, %36, %cst_17 {dimension_numbers = #tpu.dot_dimension_numbers<[1], [0], [0], [1], [0, 0, 1, 1], [], []>} : vector<8x128xf32>, vector<128x128xf32>, vector<8x128xf32> -> vector<8x128xf32>
    %c0_18 = arith.constant 0 : index
    %c0_19 = arith.constant 0 : index
    %38 = vector.load %arg5[%c0_18, %c0_19] : memref<8x128xf32, #tpu.memory_space<vmem>>, vector<8x128xf32>
    tpu.vector_store %arg5[%c0_18, %c0_19], %37 {strides = array<i32>} : memref<8x128xf32, #tpu.memory_space<vmem>>, vector<8x128xf32>,
    return
  }
  func.func @transform_0(%arg0: i32) -> (i32, i32, i32) {
    %c0_i32 = arith.constant 0 : i32
    %c0_i32_0 = arith.constant 0 : i32
    %c0_i32_1 = arith.constant 0 : i32
    return %arg0, %c0_i32, %c0_i32_0 : i32, i32, i32
  }
  func.func @transform_1(%arg0: i32) -> (i32, i32) {
    %c0_i32 = arith.constant 0 : i32
    %c0_i32_0 = arith.constant 0 : i32
    %c0_i32_1 = arith.constant 0 : i32
    return %c0_i32, %c0_i32_0 : i32, i32
  }
  func.func @transform_2(%arg0: i32) -> (i32, i32) {
    %c0_i32 = arith.constant 0 : i32
    %c0_i32_0 = arith.constant 0 : i32
    %c0_i32_1 = arith.constant 0 : i32
    return %c0_i32, %c0_i32_0 : i32, i32
  }
  func.func @transform_3(%arg0: i32) -> (i32, i32) {
    %c0_i32 = arith.constant 0 : i32
    %c0_i32_0 = arith.constant 0 : i32
    %c0_i32_1 = arith.constant 0 : i32
    return %c0_i32, %c0_i32_0 : i32, i32
  }
  func.func @transform_4(%arg0: i32) -> (i32, i32) {
    %c0_i32 = arith.constant 0 : i32
    %c0_i32_0 = arith.constant 0 : i32
    return %arg0, %c0_i32 : i32, i32
  }
}

</mosaic_0001>

<llo_original>
// kernel: tpu_custom_call.1
$region0: #{tpu_custom_call.1}
  #allocation0 [shape = 'u32[]', space=smem, size = 0x4, offset = 0x4, fixed_abs, tag = 'smem constant byte address 0x4 - core index']
  #allocation1 [shape = 'u32[144,128]{1,0:T(1,128)}', space=vmem, size = 0x12000, scoped, tag = 'internal scratch']
  %s0 = inlined_call_operand.hbm [shape: f32[16,16,128], index: 0, kind: input, shape index: {}]
  %s1 = inlined_call_operand.vmem [shape: f32[1,128], index: 1, kind: input, shape index: {}]
  %s2 = inlined_call_operand.hbm [shape: f32[128,128], index: 2, kind: input, shape index: {}]
  %s3 = inlined_call_operand.hbm [shape: f32[128,128], index: 3, kind: input, shape index: {}]
  %s4 = inlined_call_operand.hbm [shape: f32[16,128], index: 4, kind: output, shape index: {}]
  %s5 = sld [smem:[#allocation0]]
  $region61: #{tpu_custom_call.1} parent=0
    _
  %s7 = ssub.s32 1, %s5
  %s8 = scalar_select 0, %s7, %s5
  $region1: #{tpu_custom_call.1} parent=0
    #allocation2 [shape = 'u8[131072]{0}', space=vmem, size = 0x20000, scoped, tag = 'input window, operand 0']
    #allocation3 [shape = 's32[2]{0}', space=sflag, size = 0x8, scoped, tag = 'scoped memory for tpu_custom_call.1']
    #allocation4 [shape = 's32[2]{0}', space=sflag, size = 0x8, scoped, tag = 'scoped memory for tpu_custom_call.1']
    #allocation5 [shape = 'u8[65536]{0}', space=vmem, size = 0x10000, scoped, tag = 'input window, operand 2, single buffered']
    #allocation6 [shape = 's32[1]{0}', space=sflag, size = 0x4, scoped, tag = 'scoped memory for tpu_custom_call.1']
    #allocation7 [shape = 'u8[65536]{0}', space=vmem, size = 0x10000, scoped, tag = 'input window, operand 3, single buffered']
    #allocation8 [shape = 'u8[8192]{0}', space=vmem, size = 0x2000, scoped, tag = 'output window, operand 0']
    %9 = vsyncpa [#allocation3], 0
    %s10 = scalar_lea.sflag [#allocation3], 1
    %11 = vsyncpa %s10, 0
    %12 = vsyncpa [#allocation6], 0
    %13 = vsyncpa [#allocation4], 0
    %s14 = scalar_lea.sflag [#allocation4], 1
    %15 = vsyncpa %s14, 0
    loop: start=0, step=1, limit=4
    $region2: #{tpu_custom_call.1} parent=1 // loop_pre_header
      _
    $region3: #{tpu_custom_call.1} parent=1 // loop_header
      %s17 = sphi 0, %s21
      %p18 = scmp.ge.s32.totalorder %s17, 4
      %s27 = sphi 0, %s29
      %s30 = sphi 0, %s27
      %s31 = sphi 0, %s30
      %s47 = sphi 0, %s31
      %s51 = sphi 0, %s51
      %s53 = sphi 0, %s51
      %s54 = sphi 0, %s53
      %s68 = sphi 0, %s54
      %s72 = sphi 0, %s72
      %s74 = sphi 0, %s72
      %s75 = sphi 0, %s74
      %s89 = sphi 0, %s75
      %s93 = sphi 0, %s93
      %s95 = sphi 0, %s93
      %s96 = sphi 0, %s95
      %s110 = sphi 0, %s96
      %s116 = sphi 0, %s118
      %s119 = sphi 0, %s116
      %s120 = sphi 0, %s119
      %s136 = sphi 0, %s120
    $region4: #{tpu_custom_call.1} parent=1 // loop_header_branch
      %20 = sbr.rel (%p18) target = $region8
    $region5: #{tpu_custom_call.1} parent=1 // loop_body
      %s22 = ssub.s32 %s17, 1
      %s23 = ssub.s32 %s17, 2
      %s24 = sadd.s32 %s17, 1
      %s25 = ssub.s32 %s17, %s24
      %p26 = scmp.eq.s32.totalorder %s25, 0
      %s28 = sadd.s32 %s27, 1
      %s29 = scalar_select %p26, %s27, %s28
      %p32 = pneg %p26
      %p33 = scmp.eq.s32.totalorder %s17, 1
      %p34 = por %p32, %p33
      %p35 = scmp.ne.s32.totalorder %s27, %s30
      %p36 = scmp.eq.s32.totalorder %s17, 0
      %p37 = por %p35, %p36
      %p38 = scmp.ne.s32.totalorder %s27, %s30
      %p39 = scmp.eq.s32.totalorder %s22, 1
      %p40 = por %p38, %p39
      %p41 = scmp.ne.s32.totalorder %s30, %s31
      %p42 = scmp.eq.s32.totalorder %s22, 0
      %p43 = por %p41, %p42
      %p44 = scmp.ne.s32.totalorder %s30, %s31
      %p45 = scmp.eq.s32.totalorder %s23, 1
      %p46 = por %p44, %p45
      %p48 = scmp.ne.s32.totalorder %s31, %s47
      %p49 = scmp.eq.s32.totalorder %s23, 0
      %p50 = por %p48, %p49
      %s52 = sadd.s32 %s51, 1
      %p55 = scmp.eq.s32.totalorder %s17, 1
      %p56 = scmp.ne.s32.totalorder %s51, %s53
      %p57 = scmp.eq.s32.totalorder %s17, 0
      %p58 = por %p56, %p57
      %p59 = scmp.ne.s32.totalorder %s51, %s53
      %p60 = scmp.eq.s32.totalorder %s22, 1
      %p61 = por %p59, %p60
      %p62 = scmp.ne.s32.totalorder %s53, %s54
      %p63 = scmp.eq.s32.totalorder %s22, 0
      %p64 = por %p62, %p63
      %p65 = scmp.ne.s32.totalorder %s53, %s54
      %p66 = scmp.eq.s32.totalorder %s23, 1
      %p67 = por %p65, %p66
      %p69 = scmp.ne.s32.totalorder %s54, %s68
      %p70 = scmp.eq.s32.totalorder %s23, 0
      %p71 = por %p69, %p70
      %s73 = sadd.s32 %s72, 1
      %p76 = scmp.eq.s32.totalorder %s17, 1
      %p77 = scmp.ne.s32.totalorder %s72, %s74
      %p78 = scmp.eq.s32.totalorder %s17, 0
      %p79 = por %p77, %p78
      %p80 = scmp.ne.s32.totalorder %s72, %s74
      %p81 = scmp.eq.s32.totalorder %s22, 1
      %p82 = por %p80, %p81
      %p83 = scmp.ne.s32.totalorder %s74, %s75
      %p84 = scmp.eq.s32.totalorder %s22, 0
      %p85 = por %p83, %p84
      %p86 = scmp.ne.s32.totalorder %s74, %s75
      %p87 = scmp.eq.s32.totalorder %s23, 1
      %p88 = por %p86, %p87
      %p90 = scmp.ne.s32.totalorder %s75, %s89
      %p91 = scmp.eq.s32.totalorder %s23, 0
      %p92 = por %p90, %p91
      %s94 = sadd.s32 %s93, 1
      %p97 = scmp.eq.s32.totalorder %s17, 1
      %p98 = scmp.ne.s32.totalorder %s93, %s95
      %p99 = scmp.eq.s32.totalorder %s17, 0
      %p100 = por %p98, %p99
      %p101 = scmp.ne.s32.totalorder %s93, %s95
      %p102 = scmp.eq.s32.totalorder %s22, 1
      %p103 = por %p101, %p102
      %p104 = scmp.ne.s32.totalorder %s95, %s96
      %p105 = scmp.eq.s32.totalorder %s22, 0
      %p106 = por %p104, %p105
      %p107 = scmp.ne.s32.totalorder %s95, %s96
      %p108 = scmp.eq.s32.totalorder %s23, 1
      %p109 = por %p107, %p108
      %p111 = scmp.ne.s32.totalorder %s96, %s110
      %p112 = scmp.eq.s32.totalorder %s23, 0
      %p113 = por %p111, %p112
      %s114 = ssub.s32 %s17, %s24
      %p115 = scmp.eq.s32.totalorder %s114, 0
      %s117 = sadd.s32 %s116, 1
      %s118 = scalar_select %p115, %s116, %s117
      %p121 = pneg %p115
      %p122 = scmp.eq.s32.totalorder %s17, 1
      %p123 = por %p121, %p122
      %p124 = scmp.ne.s32.totalorder %s116, %s119
      %p125 = scmp.eq.s32.totalorder %s17, 0
      %p126 = por %p124, %p125
      %p127 = scmp.ne.s32.totalorder %s116, %s119
      %p128 = scmp.eq.s32.totalorder %s22, 1
      %p129 = por %p127, %p128
      %p130 = scmp.ne.s32.totalorder %s119, %s120
      %p131 = scmp.eq.s32.totalorder %s22, 0
      %p132 = por %p130, %p131
      %p133 = scmp.ne.s32.totalorder %s119, %s120
      %p134 = scmp.eq.s32.totalorder %s23, 1
      %p135 = por %p133, %p134
      %p137 = scmp.ne.s32.totalorder %s120, %s136
      %p138 = scmp.eq.s32.totalorder %s23, 0
      %p139 = por %p137, %p138
      %p140 = scmp.le.s32.totalorder 1, %s17
      %p141 = scmp.lt.s32.totalorder %s17, 3
      %p142 = pnand %p140, %p141
      %p143 = pneg %p142
      // Predicated region
      $region9: #{tpu_custom_call.1} parent=5 // pred_check
        _
      $region10: #{tpu_custom_call.1} parent=5 // pred_check_branch
        %145 = sbr.rel (%p142) target = $region12
      $region11: #{tpu_custom_call.1} parent=5 // pred_region
        %s146 = ssub.s32 %s17, 1
        // Predicated region
        $region13: #{tpu_custom_call.1} parent=11 // pred_check
          %p147 = pneg %p64
        $region14: #{tpu_custom_call.1} parent=11 // pred_check_branch
          %149 = sbr.rel (%p147) target = $region16
        $region15: #{tpu_custom_call.1} parent=11 // pred_region
          _
        $region16: #{tpu_custom_call.1} parent=11 // pred_fallthru
          _
        // Predicated region
        $region17: #{tpu_custom_call.1} parent=11 // pred_check
          %p150 = pneg %p85
        $region18: #{tpu_custom_call.1} parent=11 // pred_check_branch
          %152 = sbr.rel (%p150) target = $region20
        $region19: #{tpu_custom_call.1} parent=11 // pred_region
          %s154 = ssub.s32 2048, 2048
          %155 = vsyncadd [#allocation6], %s154
          %s156 = sshll.u32 [#allocation5], 4
          %s157 = int_to_ptr.vmem [resolvable:$true] %s156
          %162 = dma.hbm_to_vmem [thread:$0]  %s2, 2048, %s157, [#allocation6], 128, 128, 8
        $region20: #{tpu_custom_call.1} parent=11 // pred_fallthru
          _
        // Predicated region
        $region21: #{tpu_custom_call.1} parent=11 // pred_check
          %p163 = pneg %p106
        $region22: #{tpu_custom_call.1} parent=11 // pred_check_branch
          %165 = sbr.rel (%p163) target = $region24
        $region23: #{tpu_custom_call.1} parent=11 // pred_region
          %s167 = ssub.s32 2048, 2048
          %168 = vsyncadd [#allocation6], %s167
          %s169 = sshll.u32 [#allocation7], 4
          %s170 = int_to_ptr.vmem [resolvable:$true] %s169
          %175 = dma.hbm_to_vmem [thread:$0]  %s3, 2048, %s170, [#allocation6], 128, 128, 8
        $region24: #{tpu_custom_call.1} parent=11 // pred_fallthru
          _
      $region12: #{tpu_custom_call.1} parent=5 // pred_fallthru
        _
      %p176 = scmp.lt.s32.totalorder %s17, 2
      // Predicated region
      $region25: #{tpu_custom_call.1} parent=5 // pred_check
        %p177 = pneg %p176
      $region26: #{tpu_custom_call.1} parent=5 // pred_check_branch
        %179 = sbr.rel (%p177) target = $region28
      $region27: #{tpu_custom_call.1} parent=5 // pred_region
        // Predicated region
        $region29: #{tpu_custom_call.1} parent=27 // pred_check
          %p180 = pneg %p37
        $region30: #{tpu_custom_call.1} parent=27 // pred_check_branch
          %182 = sbr.rel (%p180) target = $region32
        $region31: #{tpu_custom_call.1} parent=27 // pred_region
          %s183 = sand.u32 %s27, 1
          %s184 = scalar_lea.sflag [#allocation3], %s183
          %s185 = sand.u32 %s27, 1
          %s186 = smul.addr %s185, 128
          %s187 = scalar_lea.vmem [#allocation2], %s186
          %s188 = smul.u32 8, %s17
          %s190 = ssub.s32 2048, 2048
          %191 = vsyncadd %s184, %s190
          %s192 = smul.addr %s188, 2
          %s193 = smul.addr %s192, 128
          %s194 = scalar_lea.hbm %s0, %s193
          %s195 = sshll.u32 %s187, 4
          %s196 = int_to_ptr.vmem [resolvable:$true] %s195
          %201 = dma.hbm_to_vmem [thread:$0]  %s194, 2048, %s196, %s184, 128, 128, 8
        $region32: #{tpu_custom_call.1} parent=27 // pred_fallthru
          _
      $region28: #{tpu_custom_call.1} parent=5 // pred_fallthru
        _
      %p202 = scmp.le.s32.totalorder 1, %s17
      %p203 = scmp.lt.s32.totalorder %s17, 3
      %p204 = pnand %p202, %p203
      %p205 = pneg %p204
      // Predicated region
      $region33: #{tpu_custom_call.1} parent=5 // pred_check
        _
      $region34: #{tpu_custom_call.1} parent=5 // pred_check_branch
        %207 = sbr.rel (%p204) target = $region36
      $region35: #{tpu_custom_call.1} parent=5 // pred_region
        %s208 = ssub.s32 %s17, 1
        %s209 = sand.u32 %s30, 1
        %s210 = scalar_lea.sflag [#allocation3], %s209
        %s211 = sand.u32 %s30, 1
        %s212 = smul.addr %s211, 128
        %s213 = scalar_lea.vmem [#allocation2], %s212
        // Predicated region
        $region37: #{tpu_custom_call.1} parent=35 // pred_check
          %p214 = pneg %p43
        $region38: #{tpu_custom_call.1} parent=35 // pred_check_branch
          %216 = sbr.rel (%p214) target = $region40
        $region39: #{tpu_custom_call.1} parent=35 // pred_region
          %217 = dma.done %s210, 2048
        $region40: #{tpu_custom_call.1} parent=35 // pred_fallthru
          _
        // Predicated region
        $region41: #{tpu_custom_call.1} parent=35 // pred_check
          %p218 = pneg %p85
        $region42: #{tpu_custom_call.1} parent=35 // pred_check_branch
          %220 = sbr.rel (%p218) target = $region44
        $region43: #{tpu_custom_call.1} parent=35 // pred_region
          %221 = dma.done [#allocation6], 2048
        $region44: #{tpu_custom_call.1} parent=35 // pred_fallthru
          _
        // Predicated region
        $region45: #{tpu_custom_call.1} parent=35 // pred_check
          %p222 = pneg %p106
        $region46: #{tpu_custom_call.1} parent=35 // pred_check_branch
          %224 = sbr.rel (%p222) target = $region48
        $region47: #{tpu_custom_call.1} parent=35 // pred_region
          %225 = dma.done [#allocation6], 2048
        $region48: #{tpu_custom_call.1} parent=35 // pred_fallthru
          _
        %s226 = sand.u32 %s30, 1
        %s227 = scalar_lea.sflag [#allocation3], %s226
        %s228 = sand.u32 %s30, 1
        %s229 = smul.addr %s228, 128
        %s230 = scalar_lea.vmem [#allocation2], %s229
        %p231 = pneg %p43
        %p232 = pneg %p40
        %p233 = pneg %p64
        %p234 = pneg %p61
        %p235 = pneg %p85
        %p236 = pneg %p82
        %p237 = pneg %p106
        %p238 = pneg %p103
        %p239 = pneg %p132
        %p240 = pneg %p129
        %s241 = sand.u32 %s119, 1
        %s242 = scalar_lea.sflag [#allocation4], %s241
        %s243 = sand.u32 %s119, 1
        %s244 = smul.addr %s243, 8
        %s245 = scalar_lea.vmem [#allocation8], %s244
        %s246 = smul.u32 8, %s22
        %v247 = vld [vmem:[%s213] sm:$0xff]
        %v248 = vld [vmem:[%s213 + $0x8] sm:$0xff]
        %v249 = vld [vmem:[%s213 + $0x10] sm:$0xff]
        %v250 = vld [vmem:[%s213 + $0x18] sm:$0xff]
        %v251 = vld [vmem:[%s213 + $0x20] sm:$0xff]
        %v252 = vld [vmem:[%s213 + $0x28] sm:$0xff]
        %v253 = vld [vmem:[%s213 + $0x30] sm:$0xff]
        %v254 = vld [vmem:[%s213 + $0x38] sm:$0xff]
        %v255 = vld [vmem:[%s213 + $0x40] sm:$0xff]
        %v256 = vld [vmem:[%s213 + $0x48] sm:$0xff]
        %v257 = vld [vmem:[%s213 + $0x50] sm:$0xff]
        %v258 = vld [vmem:[%s213 + $0x58] sm:$0xff]
        %v259 = vld [vmem:[%s213 + $0x60] sm:$0xff]
        %v260 = vld [vmem:[%s213 + $0x68] sm:$0xff]
        %v261 = vld [vmem:[%s213 + $0x70] sm:$0xff]
        %v262 = vld [vmem:[%s213 + $0x78] sm:$0xff]
        %v263 = vld [vmem:[%s1] sm:$0x1]
        %v265 = vlaneseq
        %v266 = vshrl.u32 %v265, 7
        %v267 = vsub.s32 0, %v266
        %v268 = vrot.slane %v263, %v267
        %v270 = vmul.f32 %v247, %v268
        %v271 = vmul.f32 %v248, %v268
        %v272 = vmul.f32 %v249, %v268
        %v273 = vmul.f32 %v250, %v268
        %v274 = vmul.f32 %v251, %v268
        %v275 = vmul.f32 %v252, %v268
        %v276 = vmul.f32 %v253, %v268
        %v277 = vmul.f32 %v254, %v268
        %v278 = vmul.f32 %v255, %v268
        %v279 = vmul.f32 %v256, %v268
        %v280 = vmul.f32 %v257, %v268
        %v281 = vmul.f32 %v258, %v268
        %v282 = vmul.f32 %v259, %v268
        %v283 = vmul.f32 %v260, %v268
        %v284 = vmul.f32 %v261, %v268
        %v285 = vmul.f32 %v262, %v268
        %286 = vadd.xlane.f32.xlu0 %v270
        %v287 = vpop.xlane.xlu0 %286
        %288 = vadd.xlane.f32.xlu0 %v271
        %v289 = vpop.xlane.xlu0 %288
        %290 = vadd.xlane.f32.xlu0 %v272
        %v291 = vpop.xlane.xlu0 %290
        %292 = vadd.xlane.f32.xlu0 %v273
        %v293 = vpop.xlane.xlu0 %292
        %294 = vadd.xlane.f32.xlu0 %v274
        %v295 = vpop.xlane.xlu0 %294
        %296 = vadd.xlane.f32.xlu0 %v275
        %v297 = vpop.xlane.xlu0 %296
        %298 = vadd.xlane.f32.xlu0 %v276
        %v299 = vpop.xlane.xlu0 %298
        %300 = vadd.xlane.f32.xlu0 %v277
        %v301 = vpop.xlane.xlu0 %300
        %302 = vadd.xlane.f32.xlu0 %v278
        %v303 = vpop.xlane.xlu0 %302
        %304 = vadd.xlane.f32.xlu0 %v279
        %v305 = vpop.xlane.xlu0 %304
        %306 = vadd.xlane.f32.xlu0 %v280
        %v307 = vpop.xlane.xlu0 %306
        %308 = vadd.xlane.f32.xlu0 %v281
        %v309 = vpop.xlane.xlu0 %308
        %310 = vadd.xlane.f32.xlu0 %v282
        %v311 = vpop.xlane.xlu0 %310
        %312 = vadd.xlane.f32.xlu0 %v283
        %v313 = vpop.xlane.xlu0 %312
        %314 = vadd.xlane.f32.xlu0 %v284
        %v315 = vpop.xlane.xlu0 %314
        %316 = vadd.xlane.f32.xlu0 %v285
        %v317 = vpop.xlane.xlu0 %316
        %v318 = vmax.f32 %v287, %v289
        %v319 = vrot.slane %v318, 4
        %v320 = vmax.f32 %v318, %v319
        %v321 = vrot.slane %v320, 2
        %v322 = vmax.f32 %v320, %v321
        %v323 = vrot.slane %v322, 1
        %v324 = vmax.f32 %v322, %v323
        %v325 = vmax.f32 %v291, %v293
        %v326 = vrot.slane %v325, 4
        %v327 = vmax.f32 %v325, %v326
        %v328 = vrot.slane %v327, 2
        %v329 = vmax.f32 %v327, %v328
        %v330 = vrot.slane %v329, 1
        %v331 = vmax.f32 %v329, %v330
        %v332 = vmax.f32 %v295, %v297
        %v333 = vrot.slane %v332, 4
        %v334 = vmax.f32 %v332, %v333
        %v335 = vrot.slane %v334, 2
        %v336 = vmax.f32 %v334, %v335
        %v337 = vrot.slane %v336, 1
        %v338 = vmax.f32 %v336, %v337
        %v339 = vmax.f32 %v299, %v301
        %v340 = vrot.slane %v339, 4
        %v341 = vmax.f32 %v339, %v340
        %v342 = vrot.slane %v341, 2
        %v343 = vmax.f32 %v341, %v342
        %v344 = vrot.slane %v343, 1
        %v345 = vmax.f32 %v343, %v344
        %v346 = vmax.f32 %v303, %v305
        %v347 = vrot.slane %v346, 4
        %v348 = vmax.f32 %v346, %v347
        %v349 = vrot.slane %v348, 2
        %v350 = vmax.f32 %v348, %v349
        %v351 = vrot.slane %v350, 1
        %v352 = vmax.f32 %v350, %v351
        %v353 = vmax.f32 %v307, %v309
        %v354 = vrot.slane %v353, 4
        %v355 = vmax.f32 %v353, %v354
        %v356 = vrot.slane %v355, 2
        %v357 = vmax.f32 %v355, %v356
        %v358 = vrot.slane %v357, 1
        %v359 = vmax.f32 %v357, %v358
        %v360 = vmax.f32 %v311, %v313
        %v361 = vrot.slane %v360, 4
        %v362 = vmax.f32 %v360, %v361
        %v363 = vrot.slane %v362, 2
        %v364 = vmax.f32 %v362, %v363
        %v365 = vrot.slane %v364, 1
        %v366 = vmax.f32 %v364, %v365
        %v367 = vmax.f32 %v315, %v317
        %v368 = vrot.slane %v367, 4
        %v369 = vmax.f32 %v367, %v368
        %v370 = vrot.slane %v369, 2
        %v371 = vmax.f32 %v369, %v370
        %v372 = vrot.slane %v371, 1
        %v373 = vmax.f32 %v371, %v372
        %v374 = vsub.f32 %v287, %v324
        %v375 = vsub.f32 %v289, %v324
        %v376 = vsub.f32 %v291, %v331
        %v377 = vsub.f32 %v293, %v331
        %v378 = vsub.f32 %v295, %v338
        %v379 = vsub.f32 %v297, %v338
        %v380 = vsub.f32 %v299, %v345
        %v381 = vsub.f32 %v301, %v345
        %v382 = vsub.f32 %v303, %v352
        %v383 = vsub.f32 %v305, %v352
        %v384 = vsub.f32 %v307, %v359
        %v385 = vsub.f32 %v309, %v359
        %v386 = vsub.f32 %v311, %v366
        %v387 = vsub.f32 %v313, %v366
        %v388 = vsub.f32 %v315, %v373
        %v389 = vsub.f32 %v317, %v373
        %v390 = vmul.f32 %v374, 1.442695
        %v391 = vpow.pop %v390
        %v392 = vmul.f32 %v375, 1.442695
        %v393 = vpow.pop %v392
        %v394 = vmul.f32 %v376, 1.442695
        %v395 = vpow.pop %v394
        %v396 = vmul.f32 %v377, 1.442695
        %v397 = vpow.pop %v396
        %v398 = vmul.f32 %v378, 1.442695
        %v399 = vpow.pop %v398
        %v400 = vmul.f32 %v379, 1.442695
        %v401 = vpow.pop %v400
        %v402 = vmul.f32 %v380, 1.442695
        %v403 = vpow.pop %v402
        %v404 = vmul.f32 %v381, 1.442695
        %v405 = vpow.pop %v404
        %v406 = vmul.f32 %v382, 1.442695
        %v407 = vpow.pop %v406
        %v408 = vmul.f32 %v383, 1.442695
        %v409 = vpow.pop %v408
        %v410 = vmul.f32 %v384, 1.442695
        %v411 = vpow.pop %v410
        %v412 = vmul.f32 %v385, 1.442695
        %v413 = vpow.pop %v412
        %v414 = vmul.f32 %v386, 1.442695
        %v415 = vpow.pop %v414
        %v416 = vmul.f32 %v387, 1.442695
        %v417 = vpow.pop %v416
        %v418 = vmul.f32 %v388, 1.442695
        %v419 = vpow.pop %v418
        %v420 = vmul.f32 %v389, 1.442695
        %v421 = vpow.pop %v420
        %v422 = vadd.f32 %v391, %v393
        %v423 = vrot.slane %v422, 4
        %v424 = vadd.f32 %v422, %v423
        %v425 = vrot.slane %v424, 2
        %v426 = vadd.f32 %v424, %v425
        %v427 = vrot.slane %v426, 1
        %v428 = vadd.f32 %v426, %v427
        %v429 = vadd.f32 %v395, %v397
        %v430 = vrot.slane %v429, 4
        %v431 = vadd.f32 %v429, %v430
        %v432 = vrot.slane %v431, 2
        %v433 = vadd.f32 %v431, %v432
        %v434 = vrot.slane %v433, 1
        %v435 = vadd.f32 %v433, %v434
        %v436 = vadd.f32 %v399, %v401
        %v437 = vrot.slane %v436, 4
        %v438 = vadd.f32 %v436, %v437
        %v439 = vrot.slane %v438, 2
        %v440 = vadd.f32 %v438, %v439
        %v441 = vrot.slane %v440, 1
        %v442 = vadd.f32 %v440, %v441
        %v443 = vadd.f32 %v403, %v405
        %v444 = vrot.slane %v443, 4
        %v445 = vadd.f32 %v443, %v444
        %v446 = vrot.slane %v445, 2
        %v447 = vadd.f32 %v445, %v446
        %v448 = vrot.slane %v447, 1
        %v449 = vadd.f32 %v447, %v448
        %v450 = vadd.f32 %v407, %v409
        %v451 = vrot.slane %v450, 4
        %v452 = vadd.f32 %v450, %v451
        %v453 = vrot.slane %v452, 2
        %v454 = vadd.f32 %v452, %v453
        %v455 = vrot.slane %v454, 1
        %v456 = vadd.f32 %v454, %v455
        %v457 = vadd.f32 %v411, %v413
        %v458 = vrot.slane %v457, 4
        %v459 = vadd.f32 %v457, %v458
        %v460 = vrot.slane %v459, 2
        %v461 = vadd.f32 %v459, %v460
        %v462 = vrot.slane %v461, 1
        %v463 = vadd.f32 %v461, %v462
        %v464 = vadd.f32 %v415, %v417
        %v465 = vrot.slane %v464, 4
        %v466 = vadd.f32 %v464, %v465
        %v467 = vrot.slane %v466, 2
        %v468 = vadd.f32 %v466, %v467
        %v469 = vrot.slane %v468, 1
        %v470 = vadd.f32 %v468, %v469
        %v471 = vadd.f32 %v419, %v421
        %v472 = vrot.slane %v471, 4
        %v473 = vadd.f32 %v471, %v472
        %v474 = vrot.slane %v473, 2
        %v475 = vadd.f32 %v473, %v474
        %v476 = vrot.slane %v475, 1
        %v477 = vadd.f32 %v475, %v476
        %v478 = vld [vmem:[#allocation5] sm:$0xff]
        %v479 = vld [vmem:[#allocation5 + $0x8] sm:$0xff]
        %v480 = vld [vmem:[#allocation5 + $0x10] sm:$0xff]
        %v481 = vld [vmem:[#allocation5 + $0x18] sm:$0xff]
        %v482 = vld [vmem:[#allocation5 + $0x20] sm:$0xff]
        %v483 = vld [vmem:[#allocation5 + $0x28] sm:$0xff]
        %v484 = vld [vmem:[#allocation5 + $0x30] sm:$0xff]
        %v485 = vld [vmem:[#allocation5 + $0x38] sm:$0xff]
        %v486 = vld [vmem:[#allocation5 + $0x40] sm:$0xff]
        %v487 = vld [vmem:[#allocation5 + $0x48] sm:$0xff]
        %v488 = vld [vmem:[#allocation5 + $0x50] sm:$0xff]
        %v489 = vld [vmem:[#allocation5 + $0x58] sm:$0xff]
        %v490 = vld [vmem:[#allocation5 + $0x60] sm:$0xff]
        %v491 = vld [vmem:[#allocation5 + $0x68] sm:$0xff]
        %v492 = vld [vmem:[#allocation5 + $0x70] sm:$0xff]
        %v493 = vld [vmem:[#allocation5 + $0x78] sm:$0xff]
        %494 = vmatprep.subr.mxu0 0.0
        %495 = vmatpush1.msra.mxu0 %v493
        %496 = vmatprep.subr.mxu0 0.0
        %497 = vmatpush1.msra.mxu0 %v492
        %498 = vmatprep.subr.mxu0 0.0
        %499 = vmatpush1.msra.mxu0 %v491
        %500 = vmatprep.subr.mxu0 0.0
        %501 = vmatpush1.msra.mxu0 %v490
        %502 = vmatprep.subr.mxu0 0.0
        %503 = vmatpush1.msra.mxu0 %v489
        %504 = vmatprep.subr.mxu0 0.0
        %505 = vmatpush1.msra.mxu0 %v488
        %506 = vmatprep.subr.mxu0 0.0
        %507 = vmatpush1.msra.mxu0 %v487
        %508 = vmatprep.subr.mxu0 0.0
        %509 = vmatpush1.msra.mxu0 %v486
        %510 = vmatprep.subr.mxu0 0.0
        %511 = vmatpush1.msra.mxu0 %v485
        %512 = vmatprep.subr.mxu0 0.0
        %513 = vmatpush1.msra.mxu0 %v484
        %514 = vmatprep.subr.mxu0 0.0
        %515 = vmatpush1.msra.mxu0 %v483
        %516 = vmatprep.subr.mxu0 0.0
        %517 = vmatpush1.msra.mxu0 %v482
        %518 = vmatprep.subr.mxu0 0.0
        %519 = vmatpush1.msra.mxu0 %v481
        %520 = vmatprep.subr.mxu0 0.0
        %521 = vmatpush1.msra.mxu0 %v480
        %522 = vmatprep.subr.mxu0 0.0
        %523 = vmatpush1.msra.mxu0 %v479
        %524 = vmatprep.subr.mxu0 0.0
        %525 = vmatpush1.msra.mxu0 %v478
        %526 = vmatprep.subr.mxu0 0.0
        %527 = vmatpush2.msra.mxu0 0.0
        %528 = vmatprep.subr.mxu0 0.0
        %529 = vmatpush2.msra.mxu0 0.0
        %530 = vmatprep.subr.mxu0 0.0
        %531 = vmatpush2.msra.mxu0 0.0
        %532 = vmatprep.subr.mxu0 0.0
        %533 = vmatpush2.msra.mxu0 0.0
        %534 = vmatprep.subr.mxu0 0.0
        %535 = vmatpush2.msra.mxu0 0.0
        %536 = vmatprep.subr.mxu0 0.0
        %537 = vmatpush2.msra.mxu0 0.0
        %538 = vmatprep.subr.mxu0 0.0
        %539 = vmatpush2.msra.mxu0 0.0
        %540 = vmatprep.subr.mxu0 0.0
        %541 = vmatpush2.msra.mxu0 0.0
        %542 = vmatprep.subr.mxu0 0.0
        %543 = vmatpush2.msra.mxu0 0.0
        %544 = vmatprep.subr.mxu0 0.0
        %545 = vmatpush2.msra.mxu0 0.0
        %546 = vmatprep.subr.mxu0 0.0
        %547 = vmatpush2.msra.mxu0 0.0
        %548 = vmatprep.subr.mxu0 0.0
        %549 = vmatpush2.msra.mxu0 0.0
        %550 = vmatprep.subr.mxu0 0.0
        %551 = vmatpush2.msra.mxu0 0.0
        %552 = vmatprep.subr.mxu0 0.0
        %553 = vmatpush2.msra.mxu0 0.0
        %554 = vmatprep.subr.mxu0 0.0
        %555 = vmatpush2.msra.mxu0 0.0
        %556 = vmatprep.subr.mxu0 0.0
        %557 = vmatpush2.msra.mxu0 0.0
        %558 = vmatprep.mubr.f32.mxu0 0.0
        %559 = vmatmul.mubr.f32.gmra.mxu0 %v247
        %v560 = vpop.f32.mrf.mxu0
        %v561 = vadd.f32 0.0, %v560
        %v562 = vpop.f32.mrf.mxu0
        %563 = vmatprep.mubr.f32.mxu0 0.0
        %564 = vmatmul.mubr.f32.gmra.mxu0 %v248
        %v565 = vpop.f32.mrf.mxu0
        %v566 = vadd.f32 0.0, %v565
        %v567 = vpop.f32.mrf.mxu0
        %568 = vmatprep.mubr.f32.mxu0 0.0
        %569 = vmatmul.mubr.f32.gmra.mxu0 %v249
        %v570 = vpop.f32.mrf.mxu0
        %v571 = vadd.f32 0.0, %v570
        %v572 = vpop.f32.mrf.mxu0
        %573 = vmatprep.mubr.f32.mxu0 0.0
        %574 = vmatmul.mubr.f32.gmra.mxu0 %v250
        %v575 = vpop.f32.mrf.mxu0
        %v576 = vadd.f32 0.0, %v575
        %v577 = vpop.f32.mrf.mxu0
        %578 = vmatprep.mubr.f32.mxu0 0.0
        %579 = vmatmul.mubr.f32.gmra.mxu0 %v251
        %v580 = vpop.f32.mrf.mxu0
        %v581 = vadd.f32 0.0, %v580
        %v582 = vpop.f32.mrf.mxu0
        %583 = vmatprep.mubr.f32.mxu0 0.0
        %584 = vmatmul.mubr.f32.gmra.mxu0 %v252
        %v585 = vpop.f32.mrf.mxu0
        %v586 = vadd.f32 0.0, %v585
        %v587 = vpop.f32.mrf.mxu0
        %588 = vmatprep.mubr.f32.mxu0 0.0
        %589 = vmatmul.mubr.f32.gmra.mxu0 %v253
        %v590 = vpop.f32.mrf.mxu0
        %v591 = vadd.f32 0.0, %v590
        %v592 = vpop.f32.mrf.mxu0
        %593 = vmatprep.mubr.f32.mxu0 0.0
        %594 = vmatmul.mubr.f32.gmra.mxu0 %v254
        %v595 = vpop.f32.mrf.mxu0
        %v596 = vadd.f32 0.0, %v595
        %v597 = vpop.f32.mrf.mxu0
        %598 = vmatprep.mubr.f32.mxu0 0.0
        %599 = vmatmul.mubr.f32.gmra.mxu0 %v255
        %v600 = vpop.f32.mrf.mxu0
        %v601 = vadd.f32 0.0, %v600
        %v602 = vpop.f32.mrf.mxu0
        %603 = vmatprep.mubr.f32.mxu0 0.0
        %604 = vmatmul.mubr.f32.gmra.mxu0 %v256
        %v605 = vpop.f32.mrf.mxu0
        %v606 = vadd.f32 0.0, %v605
        %v607 = vpop.f32.mrf.mxu0
        %608 = vmatprep.mubr.f32.mxu0 0.0
        %609 = vmatmul.mubr.f32.gmra.mxu0 %v257
        %v610 = vpop.f32.mrf.mxu0
        %v611 = vadd.f32 0.0, %v610
        %v612 = vpop.f32.mrf.mxu0
        %613 = vmatprep.mubr.f32.mxu0 0.0
        %614 = vmatmul.mubr.f32.gmra.mxu0 %v258
        %v615 = vpop.f32.mrf.mxu0
        %v616 = vadd.f32 0.0, %v615
        %v617 = vpop.f32.mrf.mxu0
        %618 = vmatprep.mubr.f32.mxu0 0.0
        %619 = vmatmul.mubr.f32.gmra.mxu0 %v259
        %v620 = vpop.f32.mrf.mxu0
        %v621 = vadd.f32 0.0, %v620
        %v622 = vpop.f32.mrf.mxu0
        %623 = vmatprep.mubr.f32.mxu0 0.0
        %624 = vmatmul.mubr.f32.gmra.mxu0 %v260
        %v625 = vpop.f32.mrf.mxu0
        %v626 = vadd.f32 0.0, %v625
        %v627 = vpop.f32.mrf.mxu0
        %628 = vmatprep.mubr.f32.mxu0 0.0
        %629 = vmatmul.mubr.f32.gmra.mxu0 %v261
        %v630 = vpop.f32.mrf.mxu0
        %v631 = vadd.f32 0.0, %v630
        %v632 = vpop.f32.mrf.mxu0
        %633 = vmatprep.mubr.f32.mxu0 0.0
        %634 = vmatmul.mubr.f32.gmra.mxu0 %v262
        %v635 = vpop.f32.mrf.mxu0
        %v636 = vadd.f32 0.0, %v635
        %v637 = vpop.f32.mrf.mxu0
        %638 = vdwg.mxu0
        %vm639 = vcmp.ne.f32.partialorder %v561, %v561
        %vm640 = vcmp.ne.f32.partialorder %v566, %v566
        %vm641 = vcmp.ne.f32.partialorder %v571, %v571
        %vm642 = vcmp.ne.f32.partialorder %v576, %v576
        %vm643 = vcmp.ne.f32.partialorder %v581, %v581
        %vm644 = vcmp.ne.f32.partialorder %v586, %v586
        %vm645 = vcmp.ne.f32.partialorder %v591, %v591
        %vm646 = vcmp.ne.f32.partialorder %v596, %v596
        %vm647 = vcmp.ne.f32.partialorder %v601, %v601
        %vm648 = vcmp.ne.f32.partialorder %v606, %v606
        %vm649 = vcmp.ne.f32.partialorder %v611, %v611
        %vm650 = vcmp.ne.f32.partialorder %v616, %v616
        %vm651 = vcmp.ne.f32.partialorder %v621, %v621
        %vm652 = vcmp.ne.f32.partialorder %v626, %v626
        %vm653 = vcmp.ne.f32.partialorder %v631, %v631
        %vm654 = vcmp.ne.f32.partialorder %v636, %v636
        %v655 = vsel %vm639, 0.0, %v561
        %v656 = vsel %vm640, 0.0, %v566
        %v657 = vsel %vm641, 0.0, %v571
        %v658 = vsel %vm642, 0.0, %v576
        %v659 = vsel %vm643, 0.0, %v581
        %v660 = vsel %vm644, 0.0, %v586
        %v661 = vsel %vm645, 0.0, %v591
        %v662 = vsel %vm646, 0.0, %v596
        %v663 = vsel %vm647, 0.0, %v601
        %v664 = vsel %vm648, 0.0, %v606
        %v665 = vsel %vm649, 0.0, %v611
        %v666 = vsel %vm650, 0.0, %v616
        %v667 = vsel %vm651, 0.0, %v621
        %v668 = vsel %vm652, 0.0, %v626
        %v669 = vsel %vm653, 0.0, %v631
        %v670 = vsel %vm654, 0.0, %v636
        %vm671 = vcmp.eq.f32.partialorder %v655, inf
        %vm672 = vcmp.eq.f32.partialorder %v656, inf
        %vm673 = vcmp.eq.f32.partialorder %v657, inf
        %vm674 = vcmp.eq.f32.partialorder %v658, inf
        %vm675 = vcmp.eq.f32.partialorder %v659, inf
        %vm676 = vcmp.eq.f32.partialorder %v660, inf
        %vm677 = vcmp.eq.f32.partialorder %v661, inf
        %vm678 = vcmp.eq.f32.partialorder %v662, inf
        %vm679 = vcmp.eq.f32.partialorder %v663, inf
        %vm680 = vcmp.eq.f32.partialorder %v664, inf
        %vm681 = vcmp.eq.f32.partialorder %v665, inf
        %vm682 = vcmp.eq.f32.partialorder %v666, inf
        %vm683 = vcmp.eq.f32.partialorder %v667, inf
        %vm684 = vcmp.eq.f32.partialorder %v668, inf
        %vm685 = vcmp.eq.f32.partialorder %v669, inf
        %vm686 = vcmp.eq.f32.partialorder %v670, inf
        %v687 = vsel %vm671, 3.4028235e+38, %v655
        %v688 = vsel %vm672, 3.4028235e+38, %v656
        %v689 = vsel %vm673, 3.4028235e+38, %v657
        %v690 = vsel %vm674, 3.4028235e+38, %v658
        %v691 = vsel %vm675, 3.4028235e+38, %v659
        %v692 = vsel %vm676, 3.4028235e+38, %v660
        %v693 = vsel %vm677, 3.4028235e+38, %v661
        %v694 = vsel %vm678, 3.4028235e+38, %v662
        %v695 = vsel %vm679, 3.4028235e+38, %v663
        %v696 = vsel %vm680, 3.4028235e+38, %v664
        %v697 = vsel %vm681, 3.4028235e+38, %v665
        %v698 = vsel %vm682, 3.4028235e+38, %v666
        %v699 = vsel %vm683, 3.4028235e+38, %v667
        %v700 = vsel %vm684, 3.4028235e+38, %v668
        %v701 = vsel %vm685, 3.4028235e+38, %v669
        %v702 = vsel %vm686, 3.4028235e+38, %v670
        %vm703 = vcmp.eq.f32.partialorder %v687, -inf
        %vm704 = vcmp.eq.f32.partialorder %v688, -inf
        %vm705 = vcmp.eq.f32.partialorder %v689, -inf
        %vm706 = vcmp.eq.f32.partialorder %v690, -inf
        %vm707 = vcmp.eq.f32.partialorder %v691, -inf
        %vm708 = vcmp.eq.f32.partialorder %v692, -inf
        %vm709 = vcmp.eq.f32.partialorder %v693, -inf
        %vm710 = vcmp.eq.f32.partialorder %v694, -inf
        %vm711 = vcmp.eq.f32.partialorder %v695, -inf
        %vm712 = vcmp.eq.f32.partialorder %v696, -inf
        %vm713 = vcmp.eq.f32.partialorder %v697, -inf
        %vm714 = vcmp.eq.f32.partialorder %v698, -inf
        %vm715 = vcmp.eq.f32.partialorder %v699, -inf
        %vm716 = vcmp.eq.f32.partialorder %v700, -inf
        %vm717 = vcmp.eq.f32.partialorder %v701, -inf
        %vm718 = vcmp.eq.f32.partialorder %v702, -inf
        %v719 = vsel %vm703, -3.4028235e+38, %v687
        %v720 = vsel %vm704, -3.4028235e+38, %v688
        %v721 = vsel %vm705, -3.4028235e+38, %v689
        %v722 = vsel %vm706, -3.4028235e+38, %v690
        %v723 = vsel %vm707, -3.4028235e+38, %v691
        %v724 = vsel %vm708, -3.4028235e+38, %v692
        %v725 = vsel %vm709, -3.4028235e+38, %v693
        %v726 = vsel %vm710, -3.4028235e+38, %v694
        %v727 = vsel %vm711, -3.4028235e+38, %v695
        %v728 = vsel %vm712, -3.4028235e+38, %v696
        %v729 = vsel %vm713, -3.4028235e+38, %v697
        %v730 = vsel %vm714, -3.4028235e+38, %v698
        %v731 = vsel %vm715, -3.4028235e+38, %v699
        %v732 = vsel %vm716, -3.4028235e+38, %v700
        %v733 = vsel %vm717, -3.4028235e+38, %v701
        %v734 = vsel %vm718, -3.4028235e+38, %v702
        %v735 = vmul.f32 %v391, %v719
        %v736 = vmul.f32 %v393, %v720
        %v737 = vmul.f32 %v395, %v721
        %v738 = vmul.f32 %v397, %v722
        %v739 = vmul.f32 %v399, %v723
        %v740 = vmul.f32 %v401, %v724
        %v741 = vmul.f32 %v403, %v725
        %v742 = vmul.f32 %v405, %v726
        %v743 = vmul.f32 %v407, %v727
        %v744 = vmul.f32 %v409, %v728
        %v745 = vmul.f32 %v411, %v729
        %v746 = vmul.f32 %v413, %v730
        %v747 = vmul.f32 %v415, %v731
        %v748 = vmul.f32 %v417, %v732
        %v749 = vmul.f32 %v419, %v733
        %v750 = vmul.f32 %v421, %v734
        %v751 = vadd.f32 %v735, %v736
        %v752 = vrot.slane %v751, 4
        %v753 = vadd.f32 %v751, %v752
        %v754 = vrot.slane %v753, 2
        %v755 = vadd.f32 %v753, %v754
        %v756 = vrot.slane %v755, 1
        %v757 = vadd.f32 %v755, %v756
        %v758 = vadd.f32 %v737, %v738
        %v759 = vrot.slane %v758, 4
        %v760 = vadd.f32 %v758, %v759
        %v761 = vrot.slane %v760, 2
        %v762 = vadd.f32 %v760, %v761
        %v763 = vrot.slane %v762, 1
        %v764 = vadd.f32 %v762, %v763
        %v765 = vadd.f32 %v739, %v740
        %v766 = vrot.slane %v765, 4
        %v767 = vadd.f32 %v765, %v766
        %v768 = vrot.slane %v767, 2
        %v769 = vadd.f32 %v767, %v768
        %v770 = vrot.slane %v769, 1
        %v771 = vadd.f32 %v769, %v770
        %v772 = vadd.f32 %v741, %v742
        %v773 = vrot.slane %v772, 4
        %v774 = vadd.f32 %v772, %v773
        %v775 = vrot.slane %v774, 2
        %v776 = vadd.f32 %v774, %v775
        %v777 = vrot.slane %v776, 1
        %v778 = vadd.f32 %v776, %v777
        %v779 = vadd.f32 %v743, %v744
        %v780 = vrot.slane %v779, 4
        %v781 = vadd.f32 %v779, %v780
        %v782 = vrot.slane %v781, 2
        %v783 = vadd.f32 %v781, %v782
        %v784 = vrot.slane %v783, 1
        %v785 = vadd.f32 %v783, %v784
        %v786 = vadd.f32 %v745, %v746
        %v787 = vrot.slane %v786, 4
        %v788 = vadd.f32 %v786, %v787
        %v789 = vrot.slane %v788, 2
        %v790 = vadd.f32 %v788, %v789
        %v791 = vrot.slane %v790, 1
        %v792 = vadd.f32 %v790, %v791
        %v793 = vadd.f32 %v747, %v748
        %v794 = vrot.slane %v793, 4
        %v795 = vadd.f32 %v793, %v794
        %v796 = vrot.slane %v795, 2
        %v797 = vadd.f32 %v795, %v796
        %v798 = vrot.slane %v797, 1
        %v799 = vadd.f32 %v797, %v798
        %v800 = vadd.f32 %v749, %v750
        %v801 = vrot.slane %v800, 4
        %v802 = vadd.f32 %v800, %v801
        %v803 = vrot.slane %v802, 2
        %v804 = vadd.f32 %v802, %v803
        %v805 = vrot.slane %v804, 1
        %v806 = vadd.f32 %v804, %v805
        %v807 = vrcp.pop %v428
        %v808 = vrcp.pop %v435
        %v809 = vrcp.pop %v442
        %v810 = vrcp.pop %v449
        %v811 = vrcp.pop %v456
        %v812 = vrcp.pop %v463
        %v813 = vrcp.pop %v470
        %v814 = vrcp.pop %v477
        %v815 = vmul.f32 %v757, %v807
        %v816 = vmul.f32 %v764, %v808
        %v817 = vmul.f32 %v771, %v809
        %v818 = vmul.f32 %v778, %v810
        %v819 = vmul.f32 %v785, %v811
        %v820 = vmul.f32 %v792, %v812
        %v821 = vmul.f32 %v799, %v813
        %v822 = vmul.f32 %v806, %v814
        %v823 = vld [vmem:[#allocation7] sm:$0xff]
        %v824 = vld [vmem:[#allocation7 + $0x8] sm:$0xff]
        %v825 = vld [vmem:[#allocation7 + $0x10] sm:$0xff]
        %v826 = vld [vmem:[#allocation7 + $0x18] sm:$0xff]
        %v827 = vld [vmem:[#allocation7 + $0x20] sm:$0xff]
        %v828 = vld [vmem:[#allocation7 + $0x28] sm:$0xff]
        %v829 = vld [vmem:[#allocation7 + $0x30] sm:$0xff]
        %v830 = vld [vmem:[#allocation7 + $0x38] sm:$0xff]
        %v831 = vld [vmem:[#allocation7 + $0x40] sm:$0xff]
        %v832 = vld [vmem:[#allocation7 + $0x48] sm:$0xff]
        %v833 = vld [vmem:[#allocation7 + $0x50] sm:$0xff]
        %v834 = vld [vmem:[#allocation7 + $0x58] sm:$0xff]
        %v835 = vld [vmem:[#allocation7 + $0x60] sm:$0xff]
        %v836 = vld [vmem:[#allocation7 + $0x68] sm:$0xff]
        %v837 = vld [vmem:[#allocation7 + $0x70] sm:$0xff]
        %v838 = vld [vmem:[#allocation7 + $0x78] sm:$0xff]
        %vm847 = vcmask 1041409
        %v848 = vsel %vm847, %v816, %v815
        %vm849 = vcmask 1042434
        %v850 = vsel %vm849, %v817, %v848
        %vm851 = vcmask 1043459
        %v852 = vsel %vm851, %v818, %v850
        %vm853 = vcmask 1044484
        %v854 = vsel %vm853, %v819, %v852
        %vm855 = vcmask 1045509
        %v856 = vsel %vm855, %v820, %v854
        %vm857 = vcmask 1046534
        %v858 = vsel %vm857, %v821, %v856
        %vm859 = vcmask 1047559
        %v860 = vsel %vm859, %v822, %v858
        %862 = vmatprep.subr.mxu0 0.0
        %863 = vmatpush1.msra.mxu0 %v838
        %864 = vmatprep.subr.mxu0 0.0
        %865 = vmatpush1.msra.mxu0 %v837
        %866 = vmatprep.subr.mxu0 0.0
        %867 = vmatpush1.msra.mxu0 %v836
        %868 = vmatprep.subr.mxu0 0.0
        %869 = vmatpush1.msra.mxu0 %v835
        %870 = vmatprep.subr.mxu0 0.0
        %871 = vmatpush1.msra.mxu0 %v834
        %872 = vmatprep.subr.mxu0 0.0
        %873 = vmatpush1.msra.mxu0 %v833
        %874 = vmatprep.subr.mxu0 0.0
        %875 = vmatpush1.msra.mxu0 %v832
        %876 = vmatprep.subr.mxu0 0.0
        %877 = vmatpush1.msra.mxu0 %v831
        %878 = vmatprep.subr.mxu0 0.0
        %879 = vmatpush1.msra.mxu0 %v830
        %880 = vmatprep.subr.mxu0 0.0
        %881 = vmatpush1.msra.mxu0 %v829
        %882 = vmatprep.subr.mxu0 0.0
        %883 = vmatpush1.msra.mxu0 %v828
        %884 = vmatprep.subr.mxu0 0.0
        %885 = vmatpush1.msra.mxu0 %v827
        %886 = vmatprep.subr.mxu0 0.0
        %887 = vmatpush1.msra.mxu0 %v826
        %888 = vmatprep.subr.mxu0 0.0
        %889 = vmatpush1.msra.mxu0 %v825
        %890 = vmatprep.subr.mxu0 0.0
        %891 = vmatpush1.msra.mxu0 %v824
        %892 = vmatprep.subr.mxu0 0.0
        %893 = vmatpush1.msra.mxu0 %v823
        %894 = vmatprep.subr.mxu0 0.0
        %895 = vmatpush2.msra.mxu0 0.0
        %896 = vmatprep.subr.mxu0 0.0
        %897 = vmatpush2.msra.mxu0 0.0
        %898 = vmatprep.subr.mxu0 0.0
        %899 = vmatpush2.msra.mxu0 0.0
        %900 = vmatprep.subr.mxu0 0.0
        %901 = vmatpush2.msra.mxu0 0.0
        %902 = vmatprep.subr.mxu0 0.0
        %903 = vmatpush2.msra.mxu0 0.0
        %904 = vmatprep.subr.mxu0 0.0
        %905 = vmatpush2.msra.mxu0 0.0
        %906 = vmatprep.subr.mxu0 0.0
        %907 = vmatpush2.msra.mxu0 0.0
        %908 = vmatprep.subr.mxu0 0.0
        %909 = vmatpush2.msra.mxu0 0.0
        %910 = vmatprep.subr.mxu0 0.0
        %911 = vmatpush2.msra.mxu0 0.0
        %912 = vmatprep.subr.mxu0 0.0
        %913 = vmatpush2.msra.mxu0 0.0
        %914 = vmatprep.subr.mxu0 0.0
        %915 = vmatpush2.msra.mxu0 0.0
        %916 = vmatprep.subr.mxu0 0.0
        %917 = vmatpush2.msra.mxu0 0.0
        %918 = vmatprep.subr.mxu0 0.0
        %919 = vmatpush2.msra.mxu0 0.0
        %920 = vmatprep.subr.mxu0 0.0
        %921 = vmatpush2.msra.mxu0 0.0
        %922 = vmatprep.subr.mxu0 0.0
        %923 = vmatpush2.msra.mxu0 0.0
        %924 = vmatprep.subr.mxu0 0.0
        %925 = vmatpush2.msra.mxu0 0.0
        %926 = vmatprep.mubr.f32.mxu0 0.0
        %927 = vmatmul.mubr.f32.gmra.mxu0 %v860
        %v928 = vpop.f32.mrf.mxu0
        %v929 = vadd.f32 0.0, %v928
        %v930 = vpop.f32.mrf.mxu0
        %931 = vdwg.mxu0
        %932 = vst [vmem:[%s245] sm:$0xff] %v929
        %s933 = sand.u32 %s119, 1
        %s934 = scalar_lea.sflag [#allocation4], %s933
        %s935 = sand.u32 %s119, 1
        %s936 = smul.addr %s935, 8
        %s937 = scalar_lea.vmem [#allocation8], %s936
        // Predicated region
        $region49: #{tpu_custom_call.1} parent=35 // pred_check
          %p938 = pneg %p129
        $region50: #{tpu_custom_call.1} parent=35 // pred_check_branch
          %940 = sbr.rel (%p938) target = $region52
        $region51: #{tpu_custom_call.1} parent=35 // pred_region
          %s942 = ssub.s32 128, 128
          %943 = vsyncadd %s934, %s942
          %s944 = smul.addr %s22, 128
          %s945 = scalar_lea.hbm %s4, %s944
          %s947 = sshll.u32 %s937, 4
          %s948 = int_to_ptr.vmem [resolvable:$true] %s947
          %950 = dma.vmem_to_hbm [thread:$0]  %s948, 128, %s945, %s934
        $region52: #{tpu_custom_call.1} parent=35 // pred_fallthru
          _
      $region36: #{tpu_custom_call.1} parent=5 // pred_fallthru
        _
      %p951 = scmp.le.s32.totalorder 2, %s17
      // Predicated region
      $region53: #{tpu_custom_call.1} parent=5 // pred_check
        %p952 = pneg %p951
      $region54: #{tpu_custom_call.1} parent=5 // pred_check_branch
        %954 = sbr.rel (%p952) target = $region56
      $region55: #{tpu_custom_call.1} parent=5 // pred_region
        %s955 = ssub.s32 %s17, 2
        // Predicated region
        $region57: #{tpu_custom_call.1} parent=55 // pred_check
          %p956 = pneg %p135
        $region58: #{tpu_custom_call.1} parent=55 // pred_check_branch
          %958 = sbr.rel (%p956) target = $region60
        $region59: #{tpu_custom_call.1} parent=55 // pred_region
          %s959 = sand.u32 %s120, 1
          %s960 = scalar_lea.sflag [#allocation4], %s959
          %s961 = sand.u32 %s120, 1
          %s962 = smul.addr %s961, 8
          %s963 = scalar_lea.vmem [#allocation8], %s962
          %964 = dma.done %s960, 128
        $region60: #{tpu_custom_call.1} parent=55 // pred_fallthru
          _
      $region56: #{tpu_custom_call.1} parent=5 // pred_fallthru
        _
    $region6: #{tpu_custom_call.1} parent=1 // loop_footer
      %s21 = sadd.s32 1, %s17
    $region7: #{tpu_custom_call.1} parent=1 // loop_footer_branch
      %16 = sbr.rel target = $region3
    $region8: #{tpu_custom_call.1} parent=1 // loop_exit
      _
    %965 = vsyncpa [#allocation3], 1
    %s966 = scalar_lea.sflag [#allocation3], 1
    %967 = vsyncpa %s966, 1
    %968 = vsyncpa [#allocation6], 1
    %969 = vsyncpa [#allocation4], 1
    %s970 = scalar_lea.sflag [#allocation4], 1
    %971 = vsyncpa %s970, 1

</llo_original>
